<compile_context>
chip_gen: v7x
topology: tpu7x:2x2x1
jax: 0.10.0
libtpu: 0.0.40
codegen_flags: <defaults>
</compile_context>

<pallas_src>
import functools
import math

import jax
import jax.numpy as jnp
from jax import lax
from jax.experimental import pallas as pl
from jax.experimental.pallas import tpu as pltpu

_LANES = 128
_INV_SQRT2 = 1.0 / math.sqrt(2.0)


# ---------------------------------------------------------------------------
# Reference (pure jnp) exact-erf GeLU, matching torch ACT2FN['gelu'].
# ---------------------------------------------------------------------------
def _gelu_jnp(x):
    xf = x.astype(jnp.float32)
    return (xf * 0.5 * (1.0 + lax.erf(xf * _INV_SQRT2))).astype(x.dtype)


# ---------------------------------------------------------------------------
# Kernel 1: fused dense (+ bias) (+ exact-erf GeLU epilogue)
# ---------------------------------------------------------------------------
def _dense_act_kernel(x_ref, w_ref, b_ref, o_ref, acc_ref, *, apply_gelu):
    k = pl.program_id(2)

    @pl.when(k == 0)
    def _init():
        acc_ref[...] = jnp.zeros_like(acc_ref)

    acc_ref[...] += jnp.dot(x_ref[...], w_ref[...],
                            preferred_element_type=jnp.float32)

    @pl.when(k == pl.num_programs(2) - 1)
    def _epilogue():
        y = acc_ref[...] + b_ref[...].astype(jnp.float32)
        if apply_gelu:
            # exact gelu: y * 0.5 * (1 + erf(y / sqrt(2)))
            y = y * 0.5 * (1.0 + lax.erf(y * _INV_SQRT2))
        o_ref[...] = y.astype(o_ref.dtype)


def dense_gelu_pallas(x, w, b, *, apply_gelu=True, out_dtype=None):
    """out = act(x @ w + b); act = exact erf GeLU when apply_gelu else identity.

    x: (..., K), w: (K, N), b: (N,).  Epilogue fused into the matmul so the
    activated output is written to HBM exactly once.
    """
    *lead, K = x.shape
    Kw, N = w.shape
    assert K == Kw and b.shape == (N,), (x.shape, w.shape, b.shape)
    M = math.prod(lead) if lead else 1
    out_dtype = out_dtype or x.dtype

    x2d = x.reshape(M, K)
    b2d = b.reshape(1, N)

    # Tile selection. (8,128) rule: block dims must be multiples of (8,128) OR
    # equal the full dim.  M / N tolerate masked partial blocks; K is the
    # reduction axis so tk must divide K exactly (otherwise garbage in the
    # overhanging region would be accumulated).
    tm = 256 if M >= 256 else M
    if N % _LANES == 0:
        tn = 256 if N >= 256 else N
    else:
        tn = N                      # full dim (always legal)
    tk = K                          # full dim fallback (always legal)
    if K % _LANES == 0:
        for cand in (512, 384, 256, 128):
            if K % cand == 0:
                tk = cand
                break

    grid = (pl.cdiv(M, tm), pl.cdiv(N, tn), K // tk)
    itemsize = jnp.dtype(x.dtype).itemsize

    out2d = pl.pallas_call(
        functools.partial(_dense_act_kernel, apply_gelu=apply_gelu),
        out_shape=jax.ShapeDtypeStruct((M, N), out_dtype),
        grid_spec=pltpu.PrefetchScalarGridSpec(
            num_scalar_prefetch=0,
            grid=grid,
            in_specs=[
                pl.BlockSpec((tm, tk), lambda i, j, k: (i, k)),
                pl.BlockSpec((tk, tn), lambda i, j, k: (k, j)),
                pl.BlockSpec((1, tn), lambda i, j, k: (0, j)),
            ],
            out_specs=pl.BlockSpec((tm, tn), lambda i, j, k: (i, j)),
            scratch_shapes=[pltpu.VMEM((tm, tn), jnp.float32)],
        ),
        compiler_params=pltpu.CompilerParams(
            dimension_semantics=("parallel", "parallel", "arbitrary"),
        ),
        cost_estimate=pl.CostEstimate(
            flops=int(2 * M * N * K + (30 * M * N if apply_gelu else 2 * M * N)),
            transcendentals=0,
            bytes_accessed=int((M * K + K * N + M * N + N) * itemsize),
        ),
    )(x2d, w, b2d)

    return out2d.reshape(*lead, N) if lead else out2d.reshape(N)


# ---------------------------------------------------------------------------
# Kernel 2: standalone streaming exact-erf GeLU
# ---------------------------------------------------------------------------
def _gelu_kernel(x_ref, o_ref):
    # Always compute in f32 (consistent across v5e/v6e/v7x), cast on store.
    x = x_ref[...].astype(jnp.float32)
    y = x * 0.5 * (1.0 + lax.erf(x * _INV_SQRT2))
    o_ref[...] = y.astype(o_ref.dtype)


def _block_budget():
    """(target block bytes, vmem_limit_bytes) per TPU generation."""
    try:
        kind = jax.devices()[0].device_kind.lower()
    except Exception:  # pragma: no cover - defensive
        kind = ""
    if "v6" in kind:
        return 8 << 20, 64 << 20      # v6e: 128 MiB VMEM, fast HBM -> big blocks
    if "v7" in kind or "tpu7" in kind:
        return 4 << 20, 32 << 20      # v7x: only 64 MiB VMEM/TC -> tighter budget
    return 2 << 20, 32 << 20          # v5e / unknown: conservative


def _pick_tile_rows(rows, row_bytes, target_bytes):
    if rows <= 32:
        return rows                                  # full-array block (legal)
    tr = max(32, target_bytes // max(row_bytes, 1))
    tr = min(tr, rows)
    if tr >= rows:
        # keep >=2 grid steps so the 'parallel' axis can shard across v7x's
        # two TensorCores (harmless on single-TC v5e/v6e)
        tr = pl.cdiv(rows, 2)
    tr = max(32, (tr // 32) * 32)                    # multiple of 32 sublanes
    return min(tr, rows)


def gelu_pallas(x: jax.Array) -> jax.Array:
    """Elementwise exact GeLU via a Pallas TPU kernel. Accepts any shape/dtype."""
    orig_shape, dt = x.shape, x.dtype
    n = x.size
    if n == 0:
        return x
    itemsize = jnp.dtype(dt).itemsize

    tail = None
    if (x.ndim >= 2 and x.shape[-1] % _LANES == 0
            and x.shape[-1] * itemsize <= (1 << 20)):
        # Common case (hidden=768 / 3072 etc.): keep the original last dim as a
        # wide lane dimension. Zero-copy reshape, no padding.
        cols = x.shape[-1]
        x2d = x.reshape(-1, cols)
    elif n % _LANES == 0:
        # Total size is 128-aligned: zero-copy flat (rows, 128) view.
        cols = _LANES
        x2d = x.reshape(-1, _LANES)
    else:
        # Truly ragged: kernel the 128-aligned prefix, compute the <128-element
        # tail with plain jnp (no full-array pad/copy on the input side).
        n_aligned = (n // _LANES) * _LANES
        flat = x.reshape(-1)
        if n_aligned == 0:
            return _gelu_jnp(x)
        cols = _LANES
        x2d = flat[:n_aligned].reshape(-1, _LANES)
        tail = flat[n_aligned:]

    rows = x2d.shape[0]
    target_bytes, vmem_limit = _block_budget()
    tr = _pick_tile_rows(rows, cols * itemsize, target_bytes)
    grid = (pl.cdiv(rows, tr),)

    out2d = pl.pallas_call(
        _gelu_kernel,
        out_shape=jax.ShapeDtypeStruct((rows, cols), dt),
        grid_spec=pltpu.PrefetchScalarGridSpec(
            num_scalar_prefetch=0,
            grid=grid,
            in_specs=[pl.BlockSpec((tr, cols), lambda i: (i, 0))],
            out_specs=pl.BlockSpec((tr, cols), lambda i: (i, 0)),
        ),
        compiler_params=pltpu.CompilerParams(
            dimension_semantics=("parallel",),
            vmem_limit_bytes=vmem_limit,
        ),
        cost_estimate=pl.CostEstimate(
            flops=int(30 * rows * cols),       # erf lowers to a VALU polynomial
            transcendentals=0,
            bytes_accessed=int(2 * rows * cols * itemsize),
        ),
    )(x2d)

    if tail is None:
        return out2d.reshape(orig_shape)
    # Ragged path only: one output concat (<128 extra elements computed in jnp).
    return jnp.concatenate([out2d.reshape(-1), _gelu_jnp(tail)]).reshape(orig_shape)


# ---------------------------------------------------------------------------
# Self-test
# ---------------------------------------------------------------------------
if __name__ == "__main__":
    key = jax.random.PRNGKey(0)
    k1, k2, k3, k4, k5, k6 = jax.random.split(key, 6)

    # Fused BERT-intermediate dense + exact-erf GeLU.
    # Small shapes consistent with the module: batch=2, total tokens=26
    # (cls + sensor streams), hidden=32, intermediate = 4*hidden = 128.
    B, T, H = 2, 26, 32
    I = 4 * H
    seq = jax.random.normal(k1, (B, T, H), dtype=jnp.float32)
    w_i = jax.random.normal(k2, (H, I), dtype=jnp.float32) / math.sqrt(H)
    b_i = jax.random.normal(k3, (I,), dtype=jnp.float32) * 0.1

    y = jax.block_until_ready(dense_gelu_pallas(seq, w_i, b_i, apply_gelu=True))
    y_ref = _gelu_jnp(jnp.dot(seq, w_i) + b_i)
    assert y.shape == (B, T, I) and y.dtype == seq.dtype
    assert jnp.allclose(y, y_ref, atol=5e-2, rtol=5e-2), float(
        jnp.max(jnp.abs(y - y_ref)))

    # Plain fused dense + bias (e.g. linear_dem / BertOutput / classifier dense).
    w_o = jax.random.normal(k4, (I, H), dtype=jnp.float32) / math.sqrt(I)
    b_o = jax.random.normal(k5, (H,), dtype=jnp.float32) * 0.1
    z = jax.block_until_ready(dense_gelu_pallas(y, w_o, b_o, apply_gelu=False))
    z_ref = jnp.dot(y, w_o) + b_o
    assert z.shape == (B, T, H)
    assert jnp.allclose(z, z_ref, atol=5e-2, rtol=5e-2)

    # Standalone GeLU: wide-lane zero-copy path (last dim multiple of 128).
    g1 = jax.block_until_ready(gelu_pallas(y))
    assert jnp.allclose(g1, _gelu_jnp(y), atol=1e-6, rtol=1e-6)

    # Standalone GeLU: flat 128-aligned path (NCHW-ish activation).
    xa = jax.random.normal(k6, (2, 4, 16, 16), dtype=jnp.float32)
    g2 = jax.block_until_ready(gelu_pallas(xa))
    assert g2.shape == xa.shape and g2.dtype == xa.dtype
    assert jnp.allclose(g2, _gelu_jnp(xa), atol=1e-6, rtol=1e-6)

    # Standalone GeLU: ragged total (aligned-prefix kernel + <128-elem jnp tail).
    xo = jax.random.normal(k1, (3, 5, 7, 11), dtype=jnp.float32)
    g3 = jax.block_until_ready(gelu_pallas(xo))
    assert jnp.allclose(g3, _gelu_jnp(xo), atol=1e-6, rtol=1e-6)

    # bf16 I/O, f32 compute (cross-generation consistent).
    xb = jax.random.normal(k2, (2, 26, 128), dtype=jnp.bfloat16)
    g4 = jax.block_until_ready(gelu_pallas(xb))
    assert g4.dtype == jnp.bfloat16
    assert jnp.allclose(g4.astype(jnp.float32),
                        _gelu_jnp(xb).astype(jnp.float32),
                        atol=2e-2, rtol=2e-2)

    print("KERNEL_OK")
</pallas_src>

<mosaic_0001>
module attributes {stable_mosaic.version = 11 : i64} {
  func.func @_dense_act_kernel(%arg0: i32, %arg1: i32, %arg2: i32, %arg3: memref<52x32xf32, #tpu.memory_space<vmem>>, %arg4: memref<32x128xf32, #tpu.memory_space<vmem>>, %arg5: memref<1x128xf32, #tpu.memory_space<vmem>>, %arg6: memref<52x128xf32, #tpu.memory_space<vmem>>, %arg7: memref<52x128xf32, #tpu.memory_space<vmem>>) attributes {dimension_semantics = [#tpu.dimension_semantics<parallel>, #tpu.dimension_semantics<parallel>, #tpu.dimension_semantics<arbitrary>], iteration_bounds = array<i64: 1, 1, 1>, scalar_prefetch = 0 : i64, scratch_operands = 1 : i64, tpu.core_type = #tpu.core_type<tc>, window_params = [{transform_indices = @transform_0, window_bounds = array<i64: 52, 32>}, {transform_indices = @transform_1, window_bounds = array<i64: 32, 128>}, {transform_indices = @transform_2, window_bounds = array<i64: 1, 128>}, {transform_indices = @transform_3, window_bounds = array<i64: 52, 128>}]} {
    %c0_i32 = arith.constant 0 : i32
    %0 = arith.cmpi eq, %arg2, %c0_i32 : i32
    %1 = arith.extui %0 : i1 to i32
    %c0_i32_0 = arith.constant 0 : i32
    %2 = arith.cmpi ne, %1, %c0_i32_0 : i32
    scf.if %2 {
      %cst_10 = arith.constant 0.000000e+00 : f32
      %12 = vector.broadcast %cst_10 : f32 to vector<52x128xf32>
      %c0_11 = arith.constant 0 : index
      %c0_12 = arith.constant 0 : index
      %13 = vector.load %arg7[%c0_11, %c0_12] : memref<52x128xf32, #tpu.memory_space<vmem>>, vector<52x128xf32>
      tpu.vector_store %arg7[%c0_11, %c0_12], %12 {strides = array<i32>} : memref<52x128xf32, #tpu.memory_space<vmem>>, vector<52x128xf32>,
    } else {
    }
    %c0 = arith.constant 0 : index
    %c0_1 = arith.constant 0 : index
    %3 = vector.load %arg7[%c0, %c0_1] : memref<52x128xf32, #tpu.memory_space<vmem>>, vector<52x128xf32>
    %c0_2 = arith.constant 0 : index
    %c0_3 = arith.constant 0 : index
    %4 = vector.load %arg3[%c0_2, %c0_3] : memref<52x32xf32, #tpu.memory_space<vmem>>, vector<52x32xf32>
    %c0_4 = arith.constant 0 : index
    %c0_5 = arith.constant 0 : index
    %5 = vector.load %arg4[%c0_4, %c0_5] : memref<32x128xf32, #tpu.memory_space<vmem>>, vector<32x128xf32>
    %cst = arith.constant dense<0.000000e+00> : vector<52x128xf32>
    %6 = tpu.matmul %4, %5, %cst {dimension_numbers = #tpu.dot_dimension_numbers<[1], [0], [0], [1], [0, 0, 1, 1], [], []>} : vector<52x32xf32>, vector<32x128xf32>, vector<52x128xf32> -> vector<52x128xf32>
    %7 = arith.addf %3, %6 : vector<52x128xf32>
    %c0_6 = arith.constant 0 : index
    %c0_7 = arith.constant 0 : index
    %8 = vector.load %arg7[%c0_6, %c0_7] : memref<52x128xf32, #tpu.memory_space<vmem>>, vector<52x128xf32>
    tpu.vector_store %arg7[%c0_6, %c0_7], %7 {strides = array<i32>} : memref<52x128xf32, #tpu.memory_space<vmem>>, vector<52x128xf32>,
    %c0_i32_8 = arith.constant 0 : i32
    %9 = arith.cmpi eq, %arg2, %c0_i32_8 : i32
    %10 = arith.extui %9 : i1 to i32
    %c0_i32_9 = arith.constant 0 : i32
    %11 = arith.cmpi ne, %10, %c0_i32_9 : i32
    scf.if %11 {
      %c0_10 = arith.constant 0 : index
      %c0_11 = arith.constant 0 : index
      %12 = vector.load %arg7[%c0_10, %c0_11] : memref<52x128xf32, #tpu.memory_space<vmem>>, vector<52x128xf32>
      %c0_12 = arith.constant 0 : index
      %c0_13 = arith.constant 0 : index
      %13 = vector.load %arg5[%c0_12, %c0_13] : memref<1x128xf32, #tpu.memory_space<vmem>>, vector<1x128xf32>
      %14 = vector.broadcast %13 : vector<1x128xf32> to vector<52x128xf32>
      %15 = arith.addf %12, %14 : vector<52x128xf32>
      %cst_14 = arith.constant 5.000000e-01 : f32
      %16 = vector.broadcast %cst_14 : f32 to vector<52x128xf32>
      %17 = arith.mulf %15, %16 : vector<52x128xf32>
      %cst_15 = arith.constant 0.707106769 : f32
      %18 = vector.broadcast %cst_15 : f32 to vector<52x128xf32>
      %19 = arith.mulf %15, %18 : vector<52x128xf32>
      %20 = math.erf %19 : vector<52x128xf32>
      %cst_16 = arith.constant 1.000000e+00 : f32
      %21 = vector.broadcast %cst_16 : f32 to vector<52x128xf32>
      %22 = arith.addf %21, %20 : vector<52x128xf32>
      %23 = arith.mulf %17, %22 : vector<52x128xf32>
      %c0_17 = arith.constant 0 : index
      %c0_18 = arith.constant 0 : index
      %24 = vector.load %arg6[%c0_17, %c0_18] : memref<52x128xf32, #tpu.memory_space<vmem>>, vector<52x128xf32>
      tpu.vector_store %arg6[%c0_17, %c0_18], %23 {strides = array<i32>} : memref<52x128xf32, #tpu.memory_space<vmem>>, vector<52x128xf32>,
    } else {
    }
    return
  }
  func.func @transform_0(%arg0: i32, %arg1: i32, %arg2: i32) -> (i32, i32) {
    %c0_i32 = arith.constant 0 : i32
    return %arg0, %arg2 : i32, i32
  }
  func.func @transform_1(%arg0: i32, %arg1: i32, %arg2: i32) -> (i32, i32) {
    %c0_i32 = arith.constant 0 : i32
    return %arg2, %arg1 : i32, i32
  }
  func.func @transform_2(%arg0: i32, %arg1: i32, %arg2: i32) -> (i32, i32) {
    %c0_i32 = arith.constant 0 : i32
    %c0_i32_0 = arith.constant 0 : i32
    return %c0_i32, %arg1 : i32, i32
  }
  func.func @transform_3(%arg0: i32, %arg1: i32, %arg2: i32) -> (i32, i32) {
    %c0_i32 = arith.constant 0 : i32
    return %arg0, %arg1 : i32, i32
  }
}

</mosaic_0001>

<llo_original>
// kernel: tpu_custom_call.1
$region0: #{tpu_custom_call.1}
  #allocation0 [shape = 'u32[]', space=smem, size = 0x4, offset = 0x4, fixed_abs, tag = 'smem constant byte address 0x4 - core index']
  #allocation1 [shape = 'u32[144,128]{1,0:T(1,128)}', space=vmem, size = 0x12000, scoped, tag = 'internal scratch']
  #allocation2 [shape = 'f32[52,128]{1,0:T(8,128)}', space=vmem, size = 0x7000, scoped, tag = 'scratch operand']
  %s0 = inlined_call_operand.vmem [shape: f32[52,32], index: 0, kind: input, shape index: {}]
  %s1 = inlined_call_operand.vmem [shape: f32[32,128], index: 1, kind: input, shape index: {}]
  %s2 = inlined_call_operand.vmem [shape: f32[1,128], index: 2, kind: input, shape index: {}]
  %s3 = inlined_call_operand.hbm [shape: f32[52,128], index: 3, kind: output, shape index: {}]
  %s4 = sld [smem:[#allocation0]]
  $region30: #{tpu_custom_call.1} parent=0
    _
  %s6 = ssub.s32 1, %s4
  %s7 = scalar_select 0, %s6, %s4
  $region1: #{tpu_custom_call.1} parent=0
    #allocation3 [shape = 'u8[28672]{0}', space=vmem, size = 0x7000, scoped, tag = 'output window, operand 0, single buffered']
    #allocation4 [shape = 's32[1]{0}', space=sflag, size = 0x4, scoped, tag = 'scoped memory for tpu_custom_call.1']
    %8 = vsyncpa [#allocation4], 0
    // Predicated region
    $region2: #{tpu_custom_call.1} parent=1 // pred_check
      _
    $region3: #{tpu_custom_call.1} parent=1 // pred_check_branch
      %10 = sbr.rel (0) target = $region5
    $region4: #{tpu_custom_call.1} parent=1 // pred_region
      _
    $region5: #{tpu_custom_call.1} parent=1 // pred_fallthru
      _
    // Predicated region
    $region6: #{tpu_custom_call.1} parent=1 // pred_check
      _
    $region7: #{tpu_custom_call.1} parent=1 // pred_check_branch
      %12 = sbr.rel (0) target = $region9
    $region8: #{tpu_custom_call.1} parent=1 // pred_region
      _
    $region9: #{tpu_custom_call.1} parent=1 // pred_fallthru
      _
    // Predicated region
    $region10: #{tpu_custom_call.1} parent=1 // pred_check
      _
    $region11: #{tpu_custom_call.1} parent=1 // pred_check_branch
      %14 = sbr.rel (0) target = $region13
    $region12: #{tpu_custom_call.1} parent=1 // pred_region
      _
    $region13: #{tpu_custom_call.1} parent=1 // pred_fallthru
      _
    %p15 = scmp.eq.s32.totalorder 0, 0
    // Predicated region
    $region14: #{tpu_custom_call.1} parent=1 // pred_check
      %p16 = pneg %p15
    $region15: #{tpu_custom_call.1} parent=1 // pred_check_branch
      %18 = sbr.rel (%p16) target = $region17
    $region16: #{tpu_custom_call.1} parent=1 // pred_region
      %19 = vst [vmem:[#allocation2] sm:$0xff] 0.0
      %20 = vst [vmem:[#allocation2 + $0x8] sm:$0xff] 0.0
      %21 = vst [vmem:[#allocation2 + $0x10] sm:$0xff] 0.0
      %22 = vst [vmem:[#allocation2 + $0x18] sm:$0xff] 0.0
      %23 = vst [vmem:[#allocation2 + $0x20] sm:$0xff] 0.0
      %24 = vst [vmem:[#allocation2 + $0x28] sm:$0xff] 0.0
      %25 = vst [vmem:[#allocation2 + $0x30] sm:$0xf] 0.0
    $region17: #{tpu_custom_call.1} parent=1 // pred_fallthru
      _
    %v26 = vld [vmem:[#allocation2] sm:$0xff]
    %v27 = vld [vmem:[#allocation2 + $0x8] sm:$0xff]
    %v28 = vld [vmem:[#allocation2 + $0x10] sm:$0xff]
    %v29 = vld [vmem:[#allocation2 + $0x18] sm:$0xff]
    %v30 = vld [vmem:[#allocation2 + $0x20] sm:$0xff]
    %v31 = vld [vmem:[#allocation2 + $0x28] sm:$0xff]
    %v32 = vld [vmem:[#allocation2 + $0x30] sm:$0xf]
    %v33 = vld [vmem:[%s0] sm:$0xff]
    %v34 = vld [vmem:[%s0 + $0x8] sm:$0xff]
    %v35 = vld [vmem:[%s0 + $0x10] sm:$0xff]
    %v36 = vld [vmem:[%s0 + $0x18] sm:$0xff]
    %v37 = vld [vmem:[%s0 + $0x20] sm:$0xff]
    %v38 = vld [vmem:[%s0 + $0x28] sm:$0xff]
    %v39 = vld [vmem:[%s0 + $0x30] sm:$0xf]
    %v40 = vld [vmem:[%s1] sm:$0xff]
    %v41 = vld [vmem:[%s1 + $0x8] sm:$0xff]
    %v42 = vld [vmem:[%s1 + $0x10] sm:$0xff]
    %v43 = vld [vmem:[%s1 + $0x18] sm:$0xff]
    %vm44 = vcmask 261120
    %v46 = vsel %vm44, %v33, 0
    %v49 = vsel %vm44, %v34, 0
    %v52 = vsel %vm44, %v35, 0
    %v55 = vsel %vm44, %v36, 0
    %v58 = vsel %vm44, %v37, 0
    %v61 = vsel %vm44, %v38, 0
    %v64 = vsel %vm44, %v39, 0
    %66 = vmatprep.subr.mxu0 0.0
    %67 = vmatpush1.msra.mxu0 %v40
    %68 = vmatprep.subr.mxu0 0.0
    %69 = vmatpush1.msra.mxu0 %v41
    %70 = vmatprep.subr.mxu0 0.0
    %71 = vmatpush1.msra.mxu0 %v42
    %72 = vmatprep.subr.mxu0 0.0
    %73 = vmatpush1.msra.mxu0 %v43
    %74 = vmatprep.subr.mxu0 0.0
    %75 = vmatpush1.msra.mxu0 0.0
    %76 = vmatprep.subr.mxu0 0.0
    %77 = vmatpush1.msra.mxu0 0.0
    %78 = vmatprep.subr.mxu0 0.0
    %79 = vmatpush1.msra.mxu0 0.0
    %80 = vmatprep.subr.mxu0 0.0
    %81 = vmatpush1.msra.mxu0 0.0
    %82 = vmatprep.subr.mxu0 0.0
    %83 = vmatpush1.msra.mxu0 0.0
    %84 = vmatprep.subr.mxu0 0.0
    %85 = vmatpush1.msra.mxu0 0.0
    %86 = vmatprep.subr.mxu0 0.0
    %87 = vmatpush1.msra.mxu0 0.0
    %88 = vmatprep.subr.mxu0 0.0
    %89 = vmatpush1.msra.mxu0 0.0
    %90 = vmatprep.subr.mxu0 0.0
    %91 = vmatpush1.msra.mxu0 0.0
    %92 = vmatprep.subr.mxu0 0.0
    %93 = vmatpush1.msra.mxu0 0.0
    %94 = vmatprep.subr.mxu0 0.0
    %95 = vmatpush1.msra.mxu0 0.0
    %96 = vmatprep.subr.mxu0 0.0
    %97 = vmatpush1.msra.mxu0 0.0
    %98 = vmatprep.subr.mxu0 0.0
    %99 = vmatpush1.msra.mxu0 0.0
    %100 = vmatprep.subr.mxu0 0.0
    %101 = vmatpush1.msra.mxu0 0.0
    %102 = vmatprep.subr.mxu0 0.0
    %103 = vmatpush1.msra.mxu0 0.0
    %104 = vmatprep.subr.mxu0 0.0
    %105 = vmatpush1.msra.mxu0 0.0
    %106 = vmatprep.subr.mxu0 0.0
    %107 = vmatpush1.msra.mxu0 0.0
    %108 = vmatprep.subr.mxu0 0.0
    %109 = vmatpush1.msra.mxu0 0.0
    %110 = vmatprep.subr.mxu0 0.0
    %111 = vmatpush1.msra.mxu0 0.0
    %112 = vmatprep.subr.mxu0 0.0
    %113 = vmatpush1.msra.mxu0 0.0
    %114 = vmatprep.subr.mxu0 0.0
    %115 = vmatpush1.msra.mxu0 0.0
    %116 = vmatprep.subr.mxu0 0.0
    %117 = vmatpush1.msra.mxu0 0.0
    %118 = vmatprep.subr.mxu0 0.0
    %119 = vmatpush1.msra.mxu0 0.0
    %120 = vmatprep.subr.mxu0 0.0
    %121 = vmatpush1.msra.mxu0 0.0
    %122 = vmatprep.subr.mxu0 0.0
    %123 = vmatpush1.msra.mxu0 0.0
    %124 = vmatprep.subr.mxu0 0.0
    %125 = vmatpush1.msra.mxu0 0.0
    %126 = vmatprep.subr.mxu0 0.0
    %127 = vmatpush1.msra.mxu0 0.0
    %128 = vmatprep.subr.mxu0 0.0
    %129 = vmatpush1.msra.mxu0 0.0
    %130 = vmatprep.mubr.f32.mxu0 0.0
    %131 = vmatmul.mubr.f32.gmra.mrb[0].mxu0 %v46
    %v132 = vpop.f32.mrb[0].mxu0
    %v133 = vadd.f32 0.0, %v132
    %v134 = vpop.f32.mrb[0].mxu0
    %135 = vmatprep.mubr.f32.mxu0 0.0
    %136 = vmatmul.mubr.f32.gmra.mrb[0].mxu0 %v49
    %v137 = vpop.f32.mrb[0].mxu0
    %v138 = vadd.f32 0.0, %v137
    %v139 = vpop.f32.mrb[0].mxu0
    %140 = vmatprep.mubr.f32.mxu0 0.0
    %141 = vmatmul.mubr.f32.gmra.mrb[0].mxu0 %v52
    %v142 = vpop.f32.mrb[0].mxu0
    %v143 = vadd.f32 0.0, %v142
    %v144 = vpop.f32.mrb[0].mxu0
    %145 = vmatprep.mubr.f32.mxu0 0.0
    %146 = vmatmul.mubr.f32.gmra.mrb[0].mxu0 %v55
    %v147 = vpop.f32.mrb[0].mxu0
    %v148 = vadd.f32 0.0, %v147
    %v149 = vpop.f32.mrb[0].mxu0
    %150 = vmatprep.mubr.f32.mxu0 0.0
    %151 = vmatmul.mubr.f32.gmra.mrb[0].mxu0 %v58
    %v152 = vpop.f32.mrb[0].mxu0
    %v153 = vadd.f32 0.0, %v152
    %v154 = vpop.f32.mrb[0].mxu0
    %155 = vmatprep.mubr.f32.mxu0 0.0
    %156 = vmatmul.mubr.f32.gmra.mrb[0].mxu0 %v61
    %v157 = vpop.f32.mrb[0].mxu0
    %v158 = vadd.f32 0.0, %v157
    %v159 = vpop.f32.mrb[0].mxu0
    %160 = vmatprep.mubr.f32.mxu0 0.0
    %161 = vmatmul.mubr.f32.gmra.mrb[0].mxu0 %v64
    %v162 = vpop.f32.mrb[0].mxu0
    %v163 = vadd.f32 0.0, %v162
    %v164 = vpop.f32.mrb[0].mxu0
    %165 = vdwg.mxu0
    %v166 = vadd.f32 %v26, %v133
    %v167 = vadd.f32 %v27, %v138
    %v168 = vadd.f32 %v28, %v143
    %v169 = vadd.f32 %v29, %v148
    %v170 = vadd.f32 %v30, %v153
    %v171 = vadd.f32 %v31, %v158
    %v172 = vadd.f32 %v32, %v163
    %173 = vst [vmem:[#allocation2] sm:$0xff] %v166
    %174 = vst [vmem:[#allocation2 + $0x8] sm:$0xff] %v167
    %175 = vst [vmem:[#allocation2 + $0x10] sm:$0xff] %v168
    %176 = vst [vmem:[#allocation2 + $0x18] sm:$0xff] %v169
    %177 = vst [vmem:[#allocation2 + $0x20] sm:$0xff] %v170
    %178 = vst [vmem:[#allocation2 + $0x28] sm:$0xff] %v171
    %179 = vst [vmem:[#allocation2 + $0x30] sm:$0xf] %v172
    // Predicated region
    $region18: #{tpu_custom_call.1} parent=1 // pred_check
      %p180 = pneg %p15
    $region19: #{tpu_custom_call.1} parent=1 // pred_check_branch
      %182 = sbr.rel (%p180) target = $region21
    $region20: #{tpu_custom_call.1} parent=1 // pred_region
      %v183 = vld [vmem:[#allocation2] sm:$0xff]
      %v184 = vld [vmem:[#allocation2 + $0x8] sm:$0xff]
      %v185 = vld [vmem:[#allocation2 + $0x10] sm:$0xff]
      %v186 = vld [vmem:[#allocation2 + $0x18] sm:$0xff]
      %v187 = vld [vmem:[#allocation2 + $0x20] sm:$0xff]
      %v188 = vld [vmem:[#allocation2 + $0x28] sm:$0xff]
      %v189 = vld [vmem:[#allocation2 + $0x30] sm:$0xf]
      %v190 = vld [vmem:[%s2] sm:$0x1]
      %v192 = vlaneseq
      %v193 = vshrl.u32 %v192, 7
      %v194 = vsub.s32 0, %v193
      %v195 = vrot.slane %v190, %v194
      %v197 = vadd.f32 %v183, %v195
      %v198 = vadd.f32 %v184, %v195
      %v199 = vadd.f32 %v185, %v195
      %v200 = vadd.f32 %v186, %v195
      %v201 = vadd.f32 %v187, %v195
      %v202 = vadd.f32 %v188, %v195
      %v203 = vadd.f32 %v189, %v195
      %v204 = vmul.f32 %v197, 0.5
      %v205 = vmul.f32 %v198, 0.5
      %v206 = vmul.f32 %v199, 0.5
      %v207 = vmul.f32 %v200, 0.5
      %v208 = vmul.f32 %v201, 0.5
      %v209 = vmul.f32 %v202, 0.5
      %v210 = vmul.f32 %v203, 0.5
      %v211 = vmul.f32 %v197, 0.70710677
      %v212 = vmul.f32 %v198, 0.70710677
      %v213 = vmul.f32 %v199, 0.70710677
      %v214 = vmul.f32 %v200, 0.70710677
      %v215 = vmul.f32 %v201, 0.70710677
      %v216 = vmul.f32 %v202, 0.70710677
      %v217 = vmul.f32 %v203, 0.70710677
      %v218 = verf.f32.pop %v211
      %v219 = verf.f32.pop %v212
      %v220 = verf.f32.pop %v213
      %v221 = verf.f32.pop %v214
      %v222 = verf.f32.pop %v215
      %v223 = verf.f32.pop %v216
      %v224 = verf.f32.pop %v217
      %v225 = vadd.f32 %v218, 1.0
      %v226 = vadd.f32 %v219, 1.0
      %v227 = vadd.f32 %v220, 1.0
      %v228 = vadd.f32 %v221, 1.0
      %v229 = vadd.f32 %v222, 1.0
      %v230 = vadd.f32 %v223, 1.0
      %v231 = vadd.f32 %v224, 1.0
      %v232 = vmul.f32 %v204, %v225
      %v233 = vmul.f32 %v205, %v226
      %v234 = vmul.f32 %v206, %v227
      %v235 = vmul.f32 %v207, %v228
      %v236 = vmul.f32 %v208, %v229
      %v237 = vmul.f32 %v209, %v230
      %v238 = vmul.f32 %v210, %v231
      %239 = vst [vmem:[#allocation3] sm:$0xff] %v232
      %240 = vst [vmem:[#allocation3 + $0x8] sm:$0xff] %v233
      %241 = vst [vmem:[#allocation3 + $0x10] sm:$0xff] %v234
      %242 = vst [vmem:[#allocation3 + $0x18] sm:$0xff] %v235
      %243 = vst [vmem:[#allocation3 + $0x20] sm:$0xff] %v236
      %244 = vst [vmem:[#allocation3 + $0x28] sm:$0xff] %v237
      %245 = vst [vmem:[#allocation3 + $0x30] sm:$0xf] %v238
    $region21: #{tpu_custom_call.1} parent=1 // pred_fallthru
      _
    // Predicated region
    $region22: #{tpu_custom_call.1} parent=1 // pred_check
      _
    $region23: #{tpu_custom_call.1} parent=1 // pred_check_branch
      %247 = sbr.rel (0) target = $region25
    $region24: #{tpu_custom_call.1} parent=1 // pred_region
      %s249 = ssub.s32 896, 896
      %250 = vsyncadd [#allocation4], %s249
      %s251 = sshll.u32 [#allocation3], 4
      %s252 = int_to_ptr.vmem [resolvable:$true] %s251
      %257 = dma.vmem_to_hbm [thread:$0]  %s252, 896, %s3, [#allocation4], 128, 128, 8
    $region25: #{tpu_custom_call.1} parent=1 // pred_fallthru
      _
    // Predicated region
    $region26: #{tpu_custom_call.1} parent=1 // pred_check
      _
    $region27: #{tpu_custom_call.1} parent=1 // pred_check_branch
      %259 = sbr.rel (0) target = $region29
    $region28: #{tpu_custom_call.1} parent=1 // pred_region
      %260 = dma.done [#allocation4], 896
    $region29: #{tpu_custom_call.1} parent=1 // pred_fallthru
      _
    %261 = vsyncpa [#allocation4], 1

</llo_original>
